<compile_context>
chip_gen: v5e
topology: v5e:2x2
jax: 0.10.0
libtpu: 0.0.40
codegen_flags: <defaults>
</compile_context>

<pallas_src>
import jax
import jax.numpy as jnp
from jax.experimental import pallas as pl
from jax.experimental.pallas import tpu as pltpu  # noqa: F401  (TPU backend)


def mnist_dual_kernel(x_ref, w1_ref, w2_ref, out_real_ref, out_dual_ref):
    """Fused fc1 -> (dropout=identity) -> fc2 dual forward.

    x_ref:  (B, K_pad)   input real part, zero-padded past K=784
    w1_ref: (K_pad, H)   fc1.weight.T, zero-padded rows past K=784
    w2_ref: (H, N_pad)   fc2.weight.T, zero-padded cols past N=10
    out_*:  (B, N_pad)   lane-dense output slabs; caller slices [:, :10]
    """
    x = x_ref[...]                       # (B, K_pad)
    w1 = w1_ref[...]                     # (K_pad, H)
    w2 = w2_ref[...]                     # (H, N_pad)

    B = x.shape[0]

    # ---- fc1: dual input is identically zero -> its matmul is dropped ----
    h_pre = jnp.dot(x, w1, preferred_element_type=jnp.float32)      # (B, H)
    h_real = jnp.tanh(h_pre)
    # x @ ones((K, H)) == row-sum(x) broadcast over H (padded cols are 0 -> exact)
    ones1 = jnp.sum(x, axis=-1, keepdims=True)                      # (B, 1)
    h_dual = ones1 * (1.0 - h_real * h_real)                        # (B, H)

    # TODO(synk): F.dropout(p=0.5, training=True) is stochastic; implemented
    # as eval-mode identity here.

    # ---- fc2: full dual layer, both matmuls fused into one MXU pass ----
    stacked = jnp.concatenate([h_real, h_dual], axis=0)             # (2B, H)
    both = jnp.dot(stacked, w2, preferred_element_type=jnp.float32)  # (2B, N_pad)
    o_pre = both[:B, :]                                             # h_real @ W2
    d_pre = both[B:, :]                                             # h_dual @ W2

    o_real = jnp.tanh(o_pre)
    ones2 = jnp.sum(h_real, axis=-1, keepdims=True)                 # (B, 1)
    o_dual = (ones2 + d_pre) * (1.0 - o_real * o_real)

    out_real_ref[...] = o_real.astype(out_real_ref.dtype)
    out_dual_ref[...] = o_dual.astype(out_dual_ref.dtype)


def _round_up(n, m):
    return ((n + m - 1) // m) * m


def mnist_model_forward(x, w1_t, w2_t):
    """MnistModel.forward.

    x:    (B, 784) float32   (torch views it as (B, 1, 784))
    w1_t: (784, 128) == fc1.weight.T
    w2_t: (128, 10)  == fc2.weight.T
    Returns (logits (B, 10), grad (B, 1, 10)) matching the torch module.
    """
    B = x.shape[0]
    xr = x.reshape(B, -1).astype(jnp.float32)        # (B, K)
    K = xr.shape[1]
    H = w1_t.shape[1]
    N = w2_t.shape[1]

    # Lane-align the contraction axis (K: 784 -> 896) and the fc2 output
    # axis (N: 10 -> 128) with exact zero padding.
    K_pad = _round_up(K, 128)
    N_pad = _round_up(N, 128)

    xr_p = jnp.pad(xr, ((0, 0), (0, K_pad - K)))
    w1_p = jnp.pad(w1_t.astype(jnp.float32), ((0, K_pad - K), (0, 0)))
    w2_p = jnp.pad(w2_t.astype(jnp.float32), ((0, 0), (0, N_pad - N)))

    o_real_p, o_dual_p = pl.pallas_call(
        mnist_dual_kernel,
        out_shape=(
            jax.ShapeDtypeStruct((B, N_pad), jnp.float32),
            jax.ShapeDtypeStruct((B, N_pad), jnp.float32),
        ),
        # Whole-array blocks: total footprint < 1 MiB, fits VMEM on any gen.
        in_specs=[
            pl.BlockSpec((B, K_pad), lambda: (0, 0)),
            pl.BlockSpec((K_pad, H), lambda: (0, 0)),
            pl.BlockSpec((H, N_pad), lambda: (0, 0)),
        ],
        out_specs=(
            pl.BlockSpec((B, N_pad), lambda: (0, 0)),
            pl.BlockSpec((B, N_pad), lambda: (0, 0)),
        ),
    )(xr_p, w1_p, w2_p)

    logits = o_real_p[:, :N].reshape(-1, N)
    grad = o_dual_p[:, :N].reshape(B, 1, N)
    return logits, grad


def _reference_forward(x, w1_t, w2_t):
    """Pure-JAX reference of the same math (un-fused, un-padded)."""
    B = x.shape[0]
    xr = x.reshape(B, -1)
    xd = jnp.zeros_like(xr)

    def layer(real, dual, w):
        out_real = jnp.tanh(real @ w)
        out_dual = (real @ jnp.ones_like(w) + dual @ w) * (1.0 - out_real ** 2)
        return out_real, out_dual

    h_real, h_dual = layer(xr, xd, w1_t)
    o_real, o_dual = layer(h_real, h_dual, w2_t)
    return o_real.reshape(-1, 10), o_dual.reshape(B, 1, 10)


if __name__ == "__main__":
    key = jax.random.PRNGKey(0)
    k_x, k_w1, k_w2 = jax.random.split(key, 3)

    B = 8
    IN, HID, OUT = 784, 128, 10

    x = jax.random.normal(k_x, (B, IN), dtype=jnp.float32)
    # Deterministic synthetic weights (shapes from nn.Linear(784,128)/(128,10)),
    # stored pre-transposed as weight.T. Bias is never used by DualMM.
    w1_t = jax.random.normal(k_w1, (IN, HID), dtype=jnp.float32) * (1.0 / IN ** 0.5)
    w2_t = jax.random.normal(k_w2, (HID, OUT), dtype=jnp.float32) * (1.0 / HID ** 0.5)

    logits, grad = jax.jit(mnist_model_forward)(x, w1_t, w2_t)
    jax.block_until_ready((logits, grad))

    ref_logits, ref_grad = _reference_forward(x, w1_t, w2_t)
    assert logits.shape == (B, OUT)
    assert grad.shape == (B, 1, OUT)
    assert jnp.allclose(logits, ref_logits, atol=1e-5, rtol=1e-5)
    assert jnp.allclose(grad, ref_grad, atol=1e-4, rtol=1e-4)

    print("KERNEL_OK")
</pallas_src>

<mosaic_0001>
module attributes {stable_mosaic.version = 11 : i64} {
  func.func @mnist_dual_kernel(%arg0: memref<8x896xf32, #tpu.memory_space<vmem>>, %arg1: memref<896x128xf32, #tpu.memory_space<vmem>>, %arg2: memref<128x128xf32, #tpu.memory_space<vmem>>, %arg3: memref<8x128xf32, #tpu.memory_space<vmem>>, %arg4: memref<8x128xf32, #tpu.memory_space<vmem>>) attributes {dimension_semantics = [], scalar_prefetch = 0 : i64, scratch_operands = 0 : i64, tpu.core_type = #tpu.core_type<tc>} {
    %c0 = arith.constant 0 : index
    %c0_0 = arith.constant 0 : index
    %0 = vector.load %arg0[%c0, %c0_0] : memref<8x896xf32, #tpu.memory_space<vmem>>, vector<8x896xf32>
    %c0_1 = arith.constant 0 : index
    %c0_2 = arith.constant 0 : index
    %1 = vector.load %arg1[%c0_1, %c0_2] : memref<896x128xf32, #tpu.memory_space<vmem>>, vector<896x128xf32>
    %c0_3 = arith.constant 0 : index
    %c0_4 = arith.constant 0 : index
    %2 = vector.load %arg2[%c0_3, %c0_4] : memref<128x128xf32, #tpu.memory_space<vmem>>, vector<128x128xf32>
    %cst = arith.constant dense<0.000000e+00> : vector<8x128xf32>
    %3 = tpu.matmul %0, %1, %cst {dimension_numbers = #tpu.dot_dimension_numbers<[1], [0], [0], [1], [0, 0, 1, 1], [], []>} : vector<8x896xf32>, vector<896x128xf32>, vector<8x128xf32> -> vector<8x128xf32>
    %4 = math.tanh %3 : vector<8x128xf32>
    %cst_5 = arith.constant dense<0.000000e+00> : vector<8xf32>
    %5 = vector.multi_reduction <add>, %0, %cst_5 [1] : vector<8x896xf32> to vector<8xf32>
    %6 = vector.shape_cast %5 : vector<8xf32> to vector<8x1xf32>
    %7 = arith.mulf %4, %4 : vector<8x128xf32>
    %cst_6 = arith.constant 1.000000e+00 : f32
    %8 = vector.broadcast %cst_6 : f32 to vector<8x128xf32>
    %9 = arith.subf %8, %7 : vector<8x128xf32>
    %10 = vector.broadcast %6 : vector<8x1xf32> to vector<8x128xf32>
    %11 = arith.mulf %10, %9 : vector<8x128xf32>
    %12 = tpu.concatenate %4, %11 in 0 : vector<8x128xf32>, vector<8x128xf32> -> vector<16x128xf32>
    %cst_7 = arith.constant dense<0.000000e+00> : vector<16x128xf32>
    %13 = tpu.matmul %12, %2, %cst_7 {dimension_numbers = #tpu.dot_dimension_numbers<[1], [0], [0], [1], [0, 0, 1, 1], [], []>} : vector<16x128xf32>, vector<128x128xf32>, vector<16x128xf32> -> vector<16x128xf32>
    %14 = vector.extract_strided_slice %13 {offsets = [0, 0], sizes = [8, 128], strides = [1, 1]} : vector<16x128xf32> to vector<8x128xf32>
    %15 = vector.extract_strided_slice %13 {offsets = [8, 0], sizes = [8, 128], strides = [1, 1]} : vector<16x128xf32> to vector<8x128xf32>
    %16 = math.tanh %14 : vector<8x128xf32>
    %cst_8 = arith.constant dense<0.000000e+00> : vector<8xf32>
    %17 = vector.multi_reduction <add>, %4, %cst_8 [1] : vector<8x128xf32> to vector<8xf32>
    %18 = vector.shape_cast %17 : vector<8xf32> to vector<8x1xf32>
    %19 = vector.broadcast %18 : vector<8x1xf32> to vector<8x128xf32>
    %20 = arith.addf %19, %15 : vector<8x128xf32>
    %21 = arith.mulf %16, %16 : vector<8x128xf32>
    %cst_9 = arith.constant 1.000000e+00 : f32
    %22 = vector.broadcast %cst_9 : f32 to vector<8x128xf32>
    %23 = arith.subf %22, %21 : vector<8x128xf32>
    %24 = arith.mulf %20, %23 : vector<8x128xf32>
    %c0_10 = arith.constant 0 : index
    %c0_11 = arith.constant 0 : index
    %25 = vector.load %arg3[%c0_10, %c0_11] : memref<8x128xf32, #tpu.memory_space<vmem>>, vector<8x128xf32>
    tpu.vector_store %arg3[%c0_10, %c0_11], %16 {strides = array<i32>} : memref<8x128xf32, #tpu.memory_space<vmem>>, vector<8x128xf32>,
    %c0_12 = arith.constant 0 : index
    %c0_13 = arith.constant 0 : index
    %26 = vector.load %arg4[%c0_12, %c0_13] : memref<8x128xf32, #tpu.memory_space<vmem>>, vector<8x128xf32>
    tpu.vector_store %arg4[%c0_12, %c0_13], %24 {strides = array<i32>} : memref<8x128xf32, #tpu.memory_space<vmem>>, vector<8x128xf32>,
    return
  }
}

</mosaic_0001>

<llo_original>
// kernel: mnist_model_forward.1
$region0: #{mnist_model_forward.1}
  #allocation0 [shape = 'u32[]', space=smem, size = 0x4, offset = 0x4, fixed_abs, tag = 'smem constant byte address 0x4 - core index']
  #allocation1 [shape = 'u32[72,128]{1,0:T(1,128)}', space=vmem, size = 0x9000, scoped, tag = 'internal scratch']
  %s0 = inlined_call_operand.vmem [shape: f32[8,896], index: 0, kind: input, shape index: {}]
  %s1 = inlined_call_operand.vmem [shape: f32[896,128], index: 1, kind: input, shape index: {}]
  %s2 = inlined_call_operand.vmem [shape: f32[128,128], index: 2, kind: input, shape index: {}]
  %s3 = inlined_call_operand.hbm [shape: f32[8,128], index: 3, kind: output, shape index: {0}]
  %s4 = inlined_call_operand.hbm [shape: f32[8,128], index: 4, kind: output, shape index: {1}]
  %5 = xla_tuple %s3, %s4
  %s6 = sld [smem:[#allocation0]]
  $region30: #{mnist_model_forward.1} parent=0
    _
  %s8 = ssub.s32 1, %s6
  %s9 = scalar_select 0, %s8, %s6
  $region1: #{mnist_model_forward.1} parent=0
    #allocation2 [shape = 'u8[4096]{0}', space=vmem, size = 0x1000, scoped, tag = 'output window, operand 0, single buffered']
    #allocation3 [shape = 's32[1]{0}', space=sflag, size = 0x4, scoped, tag = 'scoped memory for mnist_model_forward.1']
    #allocation4 [shape = 'u8[4096]{0}', space=vmem, size = 0x1000, scoped, tag = 'output window, operand 1, single buffered']
    #allocation5 [shape = 's32[1]{0}', space=sflag, size = 0x4, scoped, tag = 'scoped memory for mnist_model_forward.1']
    %10 = vsyncpa [#allocation3], 0
    %11 = vsyncpa [#allocation5], 0
    // Predicated region
    $region2: #{mnist_model_forward.1} parent=1 // pred_check
      _
    $region3: #{mnist_model_forward.1} parent=1 // pred_check_branch
      %13 = sbr.rel (0) target = $region5
    $region4: #{mnist_model_forward.1} parent=1 // pred_region
      _
    $region5: #{mnist_model_forward.1} parent=1 // pred_fallthru
      _
    // Predicated region
    $region6: #{mnist_model_forward.1} parent=1 // pred_check
      _
    $region7: #{mnist_model_forward.1} parent=1 // pred_check_branch
      %15 = sbr.rel (0) target = $region9
    $region8: #{mnist_model_forward.1} parent=1 // pred_region
      _
    $region9: #{mnist_model_forward.1} parent=1 // pred_fallthru
      _
    // Predicated region
    $region10: #{mnist_model_forward.1} parent=1 // pred_check
      _
    $region11: #{mnist_model_forward.1} parent=1 // pred_check_branch
      %17 = sbr.rel (0) target = $region13
    $region12: #{mnist_model_forward.1} parent=1 // pred_region
      _
    $region13: #{mnist_model_forward.1} parent=1 // pred_fallthru
      _
    %v18 = vld [vmem:[%s0] sm:$0xff]
    %v19 = vld [vmem:[%s0 + $0x8] sm:$0xff]
    %v20 = vld [vmem:[%s0 + $0x10] sm:$0xff]
    %v21 = vld [vmem:[%s0 + $0x18] sm:$0xff]
    %v22 = vld [vmem:[%s0 + $0x20] sm:$0xff]
    %v23 = vld [vmem:[%s0 + $0x28] sm:$0xff]
    %v24 = vld [vmem:[%s0 + $0x30] sm:$0xff]
    %v25 = vld [vmem:[%s1] sm:$0xff]
    %v26 = vld [vmem:[%s1 + $0x8] sm:$0xff]
    %v27 = vld [vmem:[%s1 + $0x10] sm:$0xff]
    %v28 = vld [vmem:[%s1 + $0x18] sm:$0xff]
    %v29 = vld [vmem:[%s1 + $0x20] sm:$0xff]
    %v30 = vld [vmem:[%s1 + $0x28] sm:$0xff]
    %v31 = vld [vmem:[%s1 + $0x30] sm:$0xff]
    %v32 = vld [vmem:[%s1 + $0x38] sm:$0xff]
    %v33 = vld [vmem:[%s1 + $0x40] sm:$0xff]
    %v34 = vld [vmem:[%s1 + $0x48] sm:$0xff]
    %v35 = vld [vmem:[%s1 + $0x50] sm:$0xff]
    %v36 = vld [vmem:[%s1 + $0x58] sm:$0xff]
    %v37 = vld [vmem:[%s1 + $0x60] sm:$0xff]
    %v38 = vld [vmem:[%s1 + $0x68] sm:$0xff]
    %v39 = vld [vmem:[%s1 + $0x70] sm:$0xff]
    %v40 = vld [vmem:[%s1 + $0x78] sm:$0xff]
    %v41 = vld [vmem:[%s1 + $0x80] sm:$0xff]
    %v42 = vld [vmem:[%s1 + $0x88] sm:$0xff]
    %v43 = vld [vmem:[%s1 + $0x90] sm:$0xff]
    %v44 = vld [vmem:[%s1 + $0x98] sm:$0xff]
    %v45 = vld [vmem:[%s1 + $0xa0] sm:$0xff]
    %v46 = vld [vmem:[%s1 + $0xa8] sm:$0xff]
    %v47 = vld [vmem:[%s1 + $0xb0] sm:$0xff]
    %v48 = vld [vmem:[%s1 + $0xb8] sm:$0xff]
    %v49 = vld [vmem:[%s1 + $0xc0] sm:$0xff]
    %v50 = vld [vmem:[%s1 + $0xc8] sm:$0xff]
    %v51 = vld [vmem:[%s1 + $0xd0] sm:$0xff]
    %v52 = vld [vmem:[%s1 + $0xd8] sm:$0xff]
    %v53 = vld [vmem:[%s1 + $0xe0] sm:$0xff]
    %v54 = vld [vmem:[%s1 + $0xe8] sm:$0xff]
    %v55 = vld [vmem:[%s1 + $0xf0] sm:$0xff]
    %v56 = vld [vmem:[%s1 + $0xf8] sm:$0xff]
    %v57 = vld [vmem:[%s1 + $0x100] sm:$0xff]
    %v58 = vld [vmem:[%s1 + $0x108] sm:$0xff]
    %v59 = vld [vmem:[%s1 + $0x110] sm:$0xff]
    %v60 = vld [vmem:[%s1 + $0x118] sm:$0xff]
    %v61 = vld [vmem:[%s1 + $0x120] sm:$0xff]
    %v62 = vld [vmem:[%s1 + $0x128] sm:$0xff]
    %v63 = vld [vmem:[%s1 + $0x130] sm:$0xff]
    %v64 = vld [vmem:[%s1 + $0x138] sm:$0xff]
    %v65 = vld [vmem:[%s1 + $0x140] sm:$0xff]
    %v66 = vld [vmem:[%s1 + $0x148] sm:$0xff]
    %v67 = vld [vmem:[%s1 + $0x150] sm:$0xff]
    %v68 = vld [vmem:[%s1 + $0x158] sm:$0xff]
    %v69 = vld [vmem:[%s1 + $0x160] sm:$0xff]
    %v70 = vld [vmem:[%s1 + $0x168] sm:$0xff]
    %v71 = vld [vmem:[%s1 + $0x170] sm:$0xff]
    %v72 = vld [vmem:[%s1 + $0x178] sm:$0xff]
    %v73 = vld [vmem:[%s1 + $0x180] sm:$0xff]
    %v74 = vld [vmem:[%s1 + $0x188] sm:$0xff]
    %v75 = vld [vmem:[%s1 + $0x190] sm:$0xff]
    %v76 = vld [vmem:[%s1 + $0x198] sm:$0xff]
    %v77 = vld [vmem:[%s1 + $0x1a0] sm:$0xff]
    %v78 = vld [vmem:[%s1 + $0x1a8] sm:$0xff]
    %v79 = vld [vmem:[%s1 + $0x1b0] sm:$0xff]
    %v80 = vld [vmem:[%s1 + $0x1b8] sm:$0xff]
    %v81 = vld [vmem:[%s1 + $0x1c0] sm:$0xff]
    %v82 = vld [vmem:[%s1 + $0x1c8] sm:$0xff]
    %v83 = vld [vmem:[%s1 + $0x1d0] sm:$0xff]
    %v84 = vld [vmem:[%s1 + $0x1d8] sm:$0xff]
    %v85 = vld [vmem:[%s1 + $0x1e0] sm:$0xff]
    %v86 = vld [vmem:[%s1 + $0x1e8] sm:$0xff]
    %v87 = vld [vmem:[%s1 + $0x1f0] sm:$0xff]
    %v88 = vld [vmem:[%s1 + $0x1f8] sm:$0xff]
    %v89 = vld [vmem:[%s1 + $0x200] sm:$0xff]
    %v90 = vld [vmem:[%s1 + $0x208] sm:$0xff]
    %v91 = vld [vmem:[%s1 + $0x210] sm:$0xff]
    %v92 = vld [vmem:[%s1 + $0x218] sm:$0xff]
    %v93 = vld [vmem:[%s1 + $0x220] sm:$0xff]
    %v94 = vld [vmem:[%s1 + $0x228] sm:$0xff]
    %v95 = vld [vmem:[%s1 + $0x230] sm:$0xff]
    %v96 = vld [vmem:[%s1 + $0x238] sm:$0xff]
    %v97 = vld [vmem:[%s1 + $0x240] sm:$0xff]
    %v98 = vld [vmem:[%s1 + $0x248] sm:$0xff]
    %v99 = vld [vmem:[%s1 + $0x250] sm:$0xff]
    %v100 = vld [vmem:[%s1 + $0x258] sm:$0xff]
    %v101 = vld [vmem:[%s1 + $0x260] sm:$0xff]
    %v102 = vld [vmem:[%s1 + $0x268] sm:$0xff]
    %v103 = vld [vmem:[%s1 + $0x270] sm:$0xff]
    %v104 = vld [vmem:[%s1 + $0x278] sm:$0xff]
    %v105 = vld [vmem:[%s1 + $0x280] sm:$0xff]
    %v106 = vld [vmem:[%s1 + $0x288] sm:$0xff]
    %v107 = vld [vmem:[%s1 + $0x290] sm:$0xff]
    %v108 = vld [vmem:[%s1 + $0x298] sm:$0xff]
    %v109 = vld [vmem:[%s1 + $0x2a0] sm:$0xff]
    %v110 = vld [vmem:[%s1 + $0x2a8] sm:$0xff]
    %v111 = vld [vmem:[%s1 + $0x2b0] sm:$0xff]
    %v112 = vld [vmem:[%s1 + $0x2b8] sm:$0xff]
    %v113 = vld [vmem:[%s1 + $0x2c0] sm:$0xff]
    %v114 = vld [vmem:[%s1 + $0x2c8] sm:$0xff]
    %v115 = vld [vmem:[%s1 + $0x2d0] sm:$0xff]
    %v116 = vld [vmem:[%s1 + $0x2d8] sm:$0xff]
    %v117 = vld [vmem:[%s1 + $0x2e0] sm:$0xff]
    %v118 = vld [vmem:[%s1 + $0x2e8] sm:$0xff]
    %v119 = vld [vmem:[%s1 + $0x2f0] sm:$0xff]
    %v120 = vld [vmem:[%s1 + $0x2f8] sm:$0xff]
    %v121 = vld [vmem:[%s1 + $0x300] sm:$0xff]
    %v122 = vld [vmem:[%s1 + $0x308] sm:$0xff]
    %v123 = vld [vmem:[%s1 + $0x310] sm:$0xff]
    %v124 = vld [vmem:[%s1 + $0x318] sm:$0xff]
    %v125 = vld [vmem:[%s1 + $0x320] sm:$0xff]
    %v126 = vld [vmem:[%s1 + $0x328] sm:$0xff]
    %v127 = vld [vmem:[%s1 + $0x330] sm:$0xff]
    %v128 = vld [vmem:[%s1 + $0x338] sm:$0xff]
    %v129 = vld [vmem:[%s1 + $0x340] sm:$0xff]
    %v130 = vld [vmem:[%s1 + $0x348] sm:$0xff]
    %v131 = vld [vmem:[%s1 + $0x350] sm:$0xff]
    %v132 = vld [vmem:[%s1 + $0x358] sm:$0xff]
    %v133 = vld [vmem:[%s1 + $0x360] sm:$0xff]
    %v134 = vld [vmem:[%s1 + $0x368] sm:$0xff]
    %v135 = vld [vmem:[%s1 + $0x370] sm:$0xff]
    %v136 = vld [vmem:[%s1 + $0x378] sm:$0xff]
    %v137 = vld [vmem:[%s2] sm:$0xff]
    %v138 = vld [vmem:[%s2 + $0x8] sm:$0xff]
    %v139 = vld [vmem:[%s2 + $0x10] sm:$0xff]
    %v140 = vld [vmem:[%s2 + $0x18] sm:$0xff]
    %v141 = vld [vmem:[%s2 + $0x20] sm:$0xff]
    %v142 = vld [vmem:[%s2 + $0x28] sm:$0xff]
    %v143 = vld [vmem:[%s2 + $0x30] sm:$0xff]
    %v144 = vld [vmem:[%s2 + $0x38] sm:$0xff]
    %v145 = vld [vmem:[%s2 + $0x40] sm:$0xff]
    %v146 = vld [vmem:[%s2 + $0x48] sm:$0xff]
    %v147 = vld [vmem:[%s2 + $0x50] sm:$0xff]
    %v148 = vld [vmem:[%s2 + $0x58] sm:$0xff]
    %v149 = vld [vmem:[%s2 + $0x60] sm:$0xff]
    %v150 = vld [vmem:[%s2 + $0x68] sm:$0xff]
    %v151 = vld [vmem:[%s2 + $0x70] sm:$0xff]
    %v152 = vld [vmem:[%s2 + $0x78] sm:$0xff]
    %153 = vmatpush.msra.mxu0 %v40
    %154 = vmatpush.msra.mxu0 %v39
    %155 = vmatpush.msra.mxu0 %v38
    %156 = vmatpush.msra.mxu0 %v37
    %157 = vmatpush.msra.mxu0 %v36
    %158 = vmatpush.msra.mxu0 %v35
    %159 = vmatpush.msra.mxu0 %v34
    %160 = vmatpush.msra.mxu0 %v33
    %161 = vmatpush.msra.mxu0 %v32
    %162 = vmatpush.msra.mxu0 %v31
    %163 = vmatpush.msra.mxu0 %v30
    %164 = vmatpush.msra.mxu0 %v29
    %165 = vmatpush.msra.mxu0 %v28
    %166 = vmatpush.msra.mxu0 %v27
    %167 = vmatpush.msra.mxu0 %v26
    %168 = vmatpush.msra.mxu0 %v25
    %169 = vmatmul.f32.gmra.mxu0 %v18
    %v170 = vpop.f32.mrf.mxu0
    %v171 = vadd.f32 0.0, %v170
    %172 = vdwg.mxu0
    %173 = vmatpush.msra.mxu0 %v56
    %174 = vmatpush.msra.mxu0 %v55
    %175 = vmatpush.msra.mxu0 %v54
    %176 = vmatpush.msra.mxu0 %v53
    %177 = vmatpush.msra.mxu0 %v52
    %178 = vmatpush.msra.mxu0 %v51
    %179 = vmatpush.msra.mxu0 %v50
    %180 = vmatpush.msra.mxu0 %v49
    %181 = vmatpush.msra.mxu0 %v48
    %182 = vmatpush.msra.mxu0 %v47
    %183 = vmatpush.msra.mxu0 %v46
    %184 = vmatpush.msra.mxu0 %v45
    %185 = vmatpush.msra.mxu0 %v44
    %186 = vmatpush.msra.mxu0 %v43
    %187 = vmatpush.msra.mxu0 %v42
    %188 = vmatpush.msra.mxu0 %v41
    %189 = vmatmul.f32.gmra.mxu0 %v19
    %v190 = vpop.f32.mrf.mxu0
    %v191 = vadd.f32 %v171, %v190
    %192 = vdwg.mxu0
    %193 = vmatpush.msra.mxu0 %v72
    %194 = vmatpush.msra.mxu0 %v71
    %195 = vmatpush.msra.mxu0 %v70
    %196 = vmatpush.msra.mxu0 %v69
    %197 = vmatpush.msra.mxu0 %v68
    %198 = vmatpush.msra.mxu0 %v67
    %199 = vmatpush.msra.mxu0 %v66
    %200 = vmatpush.msra.mxu0 %v65
    %201 = vmatpush.msra.mxu0 %v64
    %202 = vmatpush.msra.mxu0 %v63
    %203 = vmatpush.msra.mxu0 %v62
    %204 = vmatpush.msra.mxu0 %v61
    %205 = vmatpush.msra.mxu0 %v60
    %206 = vmatpush.msra.mxu0 %v59
    %207 = vmatpush.msra.mxu0 %v58
    %208 = vmatpush.msra.mxu0 %v57
    %209 = vmatmul.f32.gmra.mxu0 %v20
    %v210 = vpop.f32.mrf.mxu0
    %v211 = vadd.f32 %v191, %v210
    %212 = vdwg.mxu0
    %213 = vmatpush.msra.mxu0 %v88
    %214 = vmatpush.msra.mxu0 %v87
    %215 = vmatpush.msra.mxu0 %v86
    %216 = vmatpush.msra.mxu0 %v85
    %217 = vmatpush.msra.mxu0 %v84
    %218 = vmatpush.msra.mxu0 %v83
    %219 = vmatpush.msra.mxu0 %v82
    %220 = vmatpush.msra.mxu0 %v81
    %221 = vmatpush.msra.mxu0 %v80
    %222 = vmatpush.msra.mxu0 %v79
    %223 = vmatpush.msra.mxu0 %v78
    %224 = vmatpush.msra.mxu0 %v77
    %225 = vmatpush.msra.mxu0 %v76
    %226 = vmatpush.msra.mxu0 %v75
    %227 = vmatpush.msra.mxu0 %v74
    %228 = vmatpush.msra.mxu0 %v73
    %229 = vmatmul.f32.gmra.mxu0 %v21
    %v230 = vpop.f32.mrf.mxu0
    %v231 = vadd.f32 %v211, %v230
    %232 = vdwg.mxu0
    %233 = vmatpush.msra.mxu0 %v104
    %234 = vmatpush.msra.mxu0 %v103
    %235 = vmatpush.msra.mxu0 %v102
    %236 = vmatpush.msra.mxu0 %v101
    %237 = vmatpush.msra.mxu0 %v100
    %238 = vmatpush.msra.mxu0 %v99
    %239 = vmatpush.msra.mxu0 %v98
    %240 = vmatpush.msra.mxu0 %v97
    %241 = vmatpush.msra.mxu0 %v96
    %242 = vmatpush.msra.mxu0 %v95
    %243 = vmatpush.msra.mxu0 %v94
    %244 = vmatpush.msra.mxu0 %v93
    %245 = vmatpush.msra.mxu0 %v92
    %246 = vmatpush.msra.mxu0 %v91
    %247 = vmatpush.msra.mxu0 %v90
    %248 = vmatpush.msra.mxu0 %v89
    %249 = vmatmul.f32.gmra.mxu0 %v22
    %v250 = vpop.f32.mrf.mxu0
    %v251 = vadd.f32 %v231, %v250
    %252 = vdwg.mxu0
    %253 = vmatpush.msra.mxu0 %v120
    %254 = vmatpush.msra.mxu0 %v119
    %255 = vmatpush.msra.mxu0 %v118
    %256 = vmatpush.msra.mxu0 %v117
    %257 = vmatpush.msra.mxu0 %v116
    %258 = vmatpush.msra.mxu0 %v115
    %259 = vmatpush.msra.mxu0 %v114
    %260 = vmatpush.msra.mxu0 %v113
    %261 = vmatpush.msra.mxu0 %v112
    %262 = vmatpush.msra.mxu0 %v111
    %263 = vmatpush.msra.mxu0 %v110
    %264 = vmatpush.msra.mxu0 %v109
    %265 = vmatpush.msra.mxu0 %v108
    %266 = vmatpush.msra.mxu0 %v107
    %267 = vmatpush.msra.mxu0 %v106
    %268 = vmatpush.msra.mxu0 %v105
    %269 = vmatmul.f32.gmra.mxu0 %v23
    %v270 = vpop.f32.mrf.mxu0
    %v271 = vadd.f32 %v251, %v270
    %272 = vdwg.mxu0
    %273 = vmatpush.msra.mxu0 %v136
    %274 = vmatpush.msra.mxu0 %v135
    %275 = vmatpush.msra.mxu0 %v134
    %276 = vmatpush.msra.mxu0 %v133
    %277 = vmatpush.msra.mxu0 %v132
    %278 = vmatpush.msra.mxu0 %v131
    %279 = vmatpush.msra.mxu0 %v130
    %280 = vmatpush.msra.mxu0 %v129
    %281 = vmatpush.msra.mxu0 %v128
    %282 = vmatpush.msra.mxu0 %v127
    %283 = vmatpush.msra.mxu0 %v126
    %284 = vmatpush.msra.mxu0 %v125
    %285 = vmatpush.msra.mxu0 %v124
    %286 = vmatpush.msra.mxu0 %v123
    %287 = vmatpush.msra.mxu0 %v122
    %288 = vmatpush.msra.mxu0 %v121
    %289 = vmatmul.f32.gmra.mxu0 %v24
    %v290 = vpop.f32.mrf.mxu0
    %v291 = vadd.f32 %v271, %v290
    %292 = vdwg.mxu0
    %v293 = vtanh.pop %v291
    %v294 = vadd.f32 %v18, %v19
    %v295 = vadd.f32 %v294, %v20
    %v296 = vadd.f32 %v295, %v21
    %v297 = vadd.f32 %v296, %v22
    %v298 = vadd.f32 %v297, %v23
    %v299 = vadd.f32 %v298, %v24
    %300 = vadd.xlane.f32.xlu0 %v299
    %v301 = vpop.xlane.xlu0 %300
    %v302 = vmul.f32 %v293, %v293
    %v303 = vsub.f32 1.0, %v302
    %v304 = vmul.f32 %v301, %v303
    %305 = vmatpush.msra.mxu0 %v152
    %306 = vmatpush.msra.mxu0 %v151
    %307 = vmatpush.msra.mxu0 %v150
    %308 = vmatpush.msra.mxu0 %v149
    %309 = vmatpush.msra.mxu0 %v148
    %310 = vmatpush.msra.mxu0 %v147
    %311 = vmatpush.msra.mxu0 %v146
    %312 = vmatpush.msra.mxu0 %v145
    %313 = vmatpush.msra.mxu0 %v144
    %314 = vmatpush.msra.mxu0 %v143
    %315 = vmatpush.msra.mxu0 %v142
    %316 = vmatpush.msra.mxu0 %v141
    %317 = vmatpush.msra.mxu0 %v140
    %318 = vmatpush.msra.mxu0 %v139
    %319 = vmatpush.msra.mxu0 %v138
    %320 = vmatpush.msra.mxu0 %v137
    %321 = vmatmul.f32.gmra.mxu0 %v293
    %v322 = vpop.f32.mrf.mxu0
    %v323 = vadd.f32 0.0, %v322
    %324 = vmatmul.f32.gmra.mxu0 %v304
    %v325 = vpop.f32.mrf.mxu0
    %v326 = vadd.f32 0.0, %v325
    %327 = vdwg.mxu0
    %v328 = vtanh.pop %v323
    %329 = vadd.xlane.f32.xlu0 %v293
    %v330 = vpop.xlane.xlu0 %329
    %v331 = vadd.f32 %v330, %v326
    %v332 = vmul.f32 %v328, %v328
    %v333 = vsub.f32 1.0, %v332
    %v334 = vmul.f32 %v331, %v333
    %335 = vst [vmem:[#allocation2] sm:$0xff] %v328
    %336 = vst [vmem:[#allocation4] sm:$0xff] %v334
    // Predicated region
    $region14: #{mnist_model_forward.1} parent=1 // pred_check
      _
    $region15: #{mnist_model_forward.1} parent=1 // pred_check_branch
      %338 = sbr.rel (0) target = $region17
    $region16: #{mnist_model_forward.1} parent=1 // pred_region
      %340 = vsyncadd [#allocation3], 0
      %s342 = sshll.u32 [#allocation2], 4
      %s343 = int_to_ptr.vmem [resolvable:$true] %s342
      %s344 = sshll.u32 %s3, 4
      %s345 = int_to_ptr.hbm [resolvable:$true] %s344
      %347 = dma.vmem_to_hbm [thread:$0]  %s343, 128, %s345, [#allocation3]
    $region17: #{mnist_model_forward.1} parent=1 // pred_fallthru
      _
    // Predicated region
    $region18: #{mnist_model_forward.1} parent=1 // pred_check
      _
    $region19: #{mnist_model_forward.1} parent=1 // pred_check_branch
      %349 = sbr.rel (0) target = $region21
    $region20: #{mnist_model_forward.1} parent=1 // pred_region
      %351 = vsyncadd [#allocation5], 0
      %s353 = sshll.u32 [#allocation4], 4
      %s354 = int_to_ptr.vmem [resolvable:$true] %s353
      %s355 = sshll.u32 %s4, 4
      %s356 = int_to_ptr.hbm [resolvable:$true] %s355
      %358 = dma.vmem_to_hbm [thread:$0]  %s354, 128, %s356, [#allocation5]
    $region21: #{mnist_model_forward.1} parent=1 // pred_fallthru
      _
    // Predicated region
    $region22: #{mnist_model_forward.1} parent=1 // pred_check
      _
    $region23: #{mnist_model_forward.1} parent=1 // pred_check_branch
      %360 = sbr.rel (0) target = $region25
    $region24: #{mnist_model_forward.1} parent=1 // pred_region
      %362 = dma.done [#allocation3], 128
    $region25: #{mnist_model_forward.1} parent=1 // pred_fallthru
      _
    // Predicated region
    $region26: #{mnist_model_forward.1} parent=1 // pred_check
      _
    $region27: #{mnist_model_forward.1} parent=1 // pred_check_branch
      %364 = sbr.rel (0) target = $region29
    $region28: #{mnist_model_forward.1} parent=1 // pred_region
      %366 = dma.done [#allocation5], 128
    $region29: #{mnist_model_forward.1} parent=1 // pred_fallthru
      _
    %367 = vsyncpa [#allocation3], 1
    %368 = vsyncpa [#allocation5], 1

</llo_original>
